<compile_context>
chip_gen: v5e
topology: v5e:2x2
jax: 0.10.0
libtpu: 0.0.40
codegen_flags: <defaults>
</compile_context>

<pallas_src>
import functools
import math

import jax
import jax.numpy as jnp
from jax import lax
from jax.experimental import pallas as pl
from jax.experimental.pallas import tpu as pltpu


# ----------------------------- tiling helpers --------------------------------

def _pick_tile(n: int, target: int) -> int:
    """Largest multiple of 8 that divides n and is <= target (or n itself)."""
    if n <= target:
        return n
    for t in range(target, 7, -1):
        if n % t == 0 and t % 8 == 0:
            return t
    return n


def _pick_head_group(n_heads: int, d_k: int, target: int = 256) -> int:
    """Largest divisor G of n_heads with G*d_k ~ target (MXU fill on v6e/v7x)."""
    g = max(1, min(n_heads, target // max(d_k, 1)))
    while n_heads % g != 0:
        g -= 1
    return max(g, 1)


def _vmem_limit_bytes() -> int:
    # Generation-aware cap (review): ~48 MiB on v7x (64 MiB physical),
    # up to ~110 MiB on v5e / v6e (128 MiB physical).
    cap = 64 << 20
    try:
        info = pltpu.get_tpu_info()
        cap = int(getattr(info, "vmem_capacity_bytes", cap))
    except Exception:
        pass
    limit = min(max(cap - (16 << 20), (3 * cap) // 4), 110 << 20)
    return int(max(limit, 32 << 20))


# --------------------------- kernel 1: QKV projection -------------------------

def qkv_proj_kernel(x_ref, w_ref, q_ref, k_ref, v_ref, *, n_group: int, d_k: int):
    # x_ref:     (1, ts, D)        bf16
    # w_ref:     (1, 3, D, dg)     bf16   fused [Wq*scale | Wk | Wv] for this group
    # q/k/v_ref: (1, G, ts, d_k)   bf16   per-head layout (B, H, S, d_k) slices
    x = x_ref[0]                                                     # (ts, D)
    for i, o_ref in enumerate((q_ref, k_ref, v_ref)):
        proj = jnp.dot(x, w_ref[0, i],
                       preferred_element_type=jnp.float32).astype(o_ref.dtype)
        for g in range(n_group):                                     # static unroll
            o_ref[0, g] = proj[:, g * d_k:(g + 1) * d_k]


# ------------------- kernel 2: flash attention + out-projection ---------------

def flash_attn_kernel(q_ref, k_ref, v_ref, wo_ref, bo_ref, o_ref,
                      m_sc, l_sc, acc_sc, *, n_group: int):
    # q_ref:  (1, G, tq, d_k) bf16   (1/sqrt(d_k) already folded into Wq)
    # k_ref:  (1, G, tk, d_k) bf16
    # v_ref:  (1, G, tk, d_k) bf16
    # wo_ref: (1, G, d_k, D)  bf16
    # bo_ref: (1, D)          f32
    # o_ref:  (1, tq, D)      f32    resident across (head-group, kv) axes
    # scratch: m_sc/l_sc (G, tq, 1) f32 ; acc_sc (G, tq, d_k) f32
    hb = pl.program_id(2)
    kt = pl.program_id(3)

    @pl.when(kt == 0)
    def _():
        m_sc[...] = jnp.full_like(m_sc, -jnp.inf)
        l_sc[...] = jnp.zeros_like(l_sc)
        acc_sc[...] = jnp.zeros_like(acc_sc)

    # Online softmax, per head within the group (static unroll; G is small).
    for g in range(n_group):
        q = q_ref[0, g]                                              # (tq, d_k)
        k = k_ref[0, g]                                              # (tk, d_k)
        v = v_ref[0, g]                                              # (tk, d_k)
        s = lax.dot_general(q, k,
                            dimension_numbers=(((1,), (1,)), ((), ())),
                            preferred_element_type=jnp.float32)      # (tq, tk)
        m_prev = m_sc[g]
        m_new = jnp.maximum(m_prev, jnp.max(s, axis=-1, keepdims=True))
        alpha = jnp.exp(m_prev - m_new)
        p = jnp.exp(s - m_new)
        l_sc[g] = alpha * l_sc[g] + jnp.sum(p, axis=-1, keepdims=True)
        acc_sc[g] = alpha * acc_sc[g] + jnp.dot(
            p.astype(v.dtype), v, preferred_element_type=jnp.float32)
        m_sc[g] = m_new

    @pl.when(kt == pl.num_programs(3) - 1)
    def _():
        # Finalize softmax and project this head group into the output block.
        contrib = None
        for g in range(n_group):
            ctx = acc_sc[g] * pl.reciprocal(l_sc[g], approx=True)    # (tq, d_k)
            part = jnp.dot(ctx.astype(jnp.bfloat16), wo_ref[0, g],
                           preferred_element_type=jnp.float32)       # (tq, D)
            contrib = part if contrib is None else contrib + part

        @pl.when(hb == 0)
        def _():
            o_ref[0] = jnp.broadcast_to(bo_ref[...], o_ref.shape[1:])

        o_ref[0] = o_ref[0] + contrib


# ------------------------------- weight packing --------------------------------

def prepare_params(params, *, n_heads: int):
    """One-time weight packing (hoisted out of the per-call path).

    `params` holds weights in (in_features, out_features) layout, i.e. the
    transpose of PyTorch's nn.Linear.weight, so y = x @ W (+ b).
    """
    D = params["wq"].shape[0]
    assert D % n_heads == 0
    d_k = D // n_heads
    G = _pick_head_group(n_heads, d_k)
    Hb = n_heads // G
    dg = G * d_k
    scale = 1.0 / math.sqrt(d_k)

    def per_group_cols(w):   # (D, D) -> (Hb, D, dg): group = consecutive head cols
        return jnp.transpose(w.reshape(D, Hb, dg), (1, 0, 2))

    wqkv = jnp.stack(
        [per_group_cols(params["wq"] * scale),    # fold softmax scale into Wq
         per_group_cols(params["wk"]),
         per_group_cols(params["wv"])], axis=1).astype(jnp.bfloat16)  # (Hb,3,D,dg)
    wo = params["wo"].reshape(Hb, G, d_k, D).astype(jnp.bfloat16)      # (Hb,G,dk,D)
    bo = params["bo"].reshape(1, D).astype(jnp.float32)                # (1, D)
    return {"wqkv": wqkv, "wo": wo, "bo": bo}


# --------------------------------- wrapper -------------------------------------

def multi_head_attention(x, packed, *, n_heads: int):
    B, S, D = x.shape
    d_k = D // n_heads
    Hb, _, _, dg = packed["wqkv"].shape
    G = dg // d_k
    assert Hb * G == n_heads

    ts = _pick_tile(S, 512)   # projection sequence tile
    tq = _pick_tile(S, 512)   # attention query tile
    tk = _pick_tile(S, 512)   # attention kv tile
    vmem_limit = _vmem_limit_bytes()

    x_bf16 = x.astype(jnp.bfloat16)   # halve x DMA / double-buffer footprint

    # ---- pass 1: fused per-group QKV projection, sequence tiled ----
    qkv_shape = jax.ShapeDtypeStruct((B, n_heads, S, d_k), jnp.bfloat16)
    q, k, v = pl.pallas_call(
        functools.partial(qkv_proj_kernel, n_group=G, d_k=d_k),
        out_shape=(qkv_shape, qkv_shape, qkv_shape),
        grid_spec=pltpu.PrefetchScalarGridSpec(
            num_scalar_prefetch=0,
            grid=(B, Hb, S // ts),
            in_specs=[
                pl.BlockSpec((1, ts, D), lambda b, hb, st: (b, st, 0)),        # x
                pl.BlockSpec((1, 3, D, dg), lambda b, hb, st: (hb, 0, 0, 0)),  # Wqkv
            ],
            out_specs=[
                pl.BlockSpec((1, G, ts, d_k), lambda b, hb, st: (b, hb, st, 0)),
                pl.BlockSpec((1, G, ts, d_k), lambda b, hb, st: (b, hb, st, 0)),
                pl.BlockSpec((1, G, ts, d_k), lambda b, hb, st: (b, hb, st, 0)),
            ],
        ),
        compiler_params=pltpu.CompilerParams(
            dimension_semantics=("parallel", "parallel", "arbitrary"),
            vmem_limit_bytes=vmem_limit,
        ),
    )(x_bf16, packed["wqkv"])

    # ---- pass 2: flash attention + grouped output projection ----
    # Grid: (batch, q-tile, head-group, kv-tile).  Output block is resident
    # across the two innermost (reduction) axes; both are marked "arbitrary".
    # NOTE(v7x): batch / q-tile axes are "parallel" for TC sharding.
    out = pl.pallas_call(
        functools.partial(flash_attn_kernel, n_group=G),
        out_shape=jax.ShapeDtypeStruct((B, S, D), jnp.float32),
        grid_spec=pltpu.PrefetchScalarGridSpec(
            num_scalar_prefetch=0,
            grid=(B, S // tq, Hb, S // tk),
            in_specs=[
                pl.BlockSpec((1, G, tq, d_k), lambda b, qt, hb, kt: (b, hb, qt, 0)),
                pl.BlockSpec((1, G, tk, d_k), lambda b, qt, hb, kt: (b, hb, kt, 0)),
                pl.BlockSpec((1, G, tk, d_k), lambda b, qt, hb, kt: (b, hb, kt, 0)),
                pl.BlockSpec((1, G, d_k, D), lambda b, qt, hb, kt: (hb, 0, 0, 0)),
                pl.BlockSpec((1, D), lambda b, qt, hb, kt: (0, 0)),
            ],
            out_specs=pl.BlockSpec((1, tq, D), lambda b, qt, hb, kt: (b, qt, 0)),
            scratch_shapes=[
                pltpu.VMEM((G, tq, 1), jnp.float32),     # m (running max)
                pltpu.VMEM((G, tq, 1), jnp.float32),     # l (running denom)
                pltpu.VMEM((G, tq, d_k), jnp.float32),   # acc (running ctx)
            ],
        ),
        compiler_params=pltpu.CompilerParams(
            dimension_semantics=("parallel", "parallel", "arbitrary", "arbitrary"),
            vmem_limit_bytes=vmem_limit,
        ),
    )(q, k, v, packed["wo"], packed["bo"])
    return out


# ---------------------------- deterministic init -------------------------------

def xavier_uniform(key, fan_in, fan_out):
    bound = math.sqrt(6.0 / (fan_in + fan_out))
    # stored (in_features, out_features) == transposed PyTorch weight
    return jax.random.uniform(key, (fan_in, fan_out), jnp.float32, -bound, bound)


def init_params(key, d_model):
    ks = jax.random.split(key, 4)
    D = d_model
    return {
        "wq": xavier_uniform(ks[0], D, D),
        "wk": xavier_uniform(ks[1], D, D),
        "wv": xavier_uniform(ks[2], D, D),
        "wo": xavier_uniform(ks[3], D, D),
        "bo": jnp.zeros((D,), jnp.float32),
    }


# ----------------------- pure-JAX reference (checking) -------------------------

def reference_mha(x, p, n_heads):
    B, S, D = x.shape
    d_k = D // n_heads

    def split(t):
        return t.reshape(B, S, n_heads, d_k).transpose(0, 2, 1, 3)

    q = split(x @ p["wq"])
    k = split(x @ p["wk"])
    v = split(x @ p["wv"])
    s = jnp.einsum("bhqd,bhkd->bhqk", q, k) / math.sqrt(d_k)
    pr = jax.nn.softmax(s, axis=-1)
    ctx = jnp.einsum("bhqk,bhkd->bhqd", pr, v).transpose(0, 2, 1, 3).reshape(B, S, D)
    return ctx @ p["wo"] + p["bo"]


# ------------------------------------ main --------------------------------------

if __name__ == "__main__":
    B, S, D, H = 2, 8, 32, 4   # batch, seq, d_model, n_heads

    key = jax.random.PRNGKey(0)
    kx, kp = jax.random.split(key)
    x = jax.random.normal(kx, (B, S, D), jnp.float32)
    raw_params = init_params(kp, D)

    # One-time weight packing (hoisted out of the per-call path).
    packed = prepare_params(raw_params, n_heads=H)

    out = multi_head_attention(x, packed, n_heads=H)
    out = jax.block_until_ready(out)

    ref = reference_mha(x, raw_params, H)
    assert out.shape == (B, S, D)
    max_err = jnp.max(jnp.abs(out - ref))
    # Tolerance: bf16 MXU operands + approx reciprocal in the softmax denom.
    assert jnp.allclose(out, ref, atol=5e-2, rtol=5e-2), \
        f"mismatch vs reference (max abs err {max_err})"

    print("KERNEL_OK")
</pallas_src>

<mosaic_0001>
module attributes {stable_mosaic.version = 11 : i64} {
  func.func @qkv_proj_kernel(%arg0: i32, %arg1: i32, %arg2: i32, %arg3: memref<1x8x32xbf16, #tpu.memory_space<vmem>>, %arg4: memref<1x3x32x32xbf16, #tpu.memory_space<vmem>>, %arg5: memref<1x4x8x8xbf16, #tpu.memory_space<vmem>>, %arg6: memref<1x4x8x8xbf16, #tpu.memory_space<vmem>>, %arg7: memref<1x4x8x8xbf16, #tpu.memory_space<vmem>>) attributes {dimension_semantics = [#tpu.dimension_semantics<parallel>, #tpu.dimension_semantics<parallel>, #tpu.dimension_semantics<arbitrary>], iteration_bounds = array<i64: 2, 1, 1>, scalar_prefetch = 0 : i64, scratch_operands = 0 : i64, tpu.core_type = #tpu.core_type<tc>, window_params = [{transform_indices = @transform_0, window_bounds = array<i64: 1, 8, 32>}, {transform_indices = @transform_1, window_bounds = array<i64: 1, 3, 32, 32>}, {transform_indices = @transform_2, window_bounds = array<i64: 1, 4, 8, 8>}, {transform_indices = @transform_3, window_bounds = array<i64: 1, 4, 8, 8>}, {transform_indices = @transform_4, window_bounds = array<i64: 1, 4, 8, 8>}]} {
    %c0 = arith.constant 0 : index
    %c0_0 = arith.constant 0 : index
    %c0_1 = arith.constant 0 : index
    %0 = vector.load %arg3[%c0, %c0_0, %c0_1] : memref<1x8x32xbf16, #tpu.memory_space<vmem>>, vector<1x8x32xbf16>
    %1 = vector.shape_cast %0 : vector<1x8x32xbf16> to vector<8x32xbf16>
    %c0_2 = arith.constant 0 : index
    %c0_3 = arith.constant 0 : index
    %c0_4 = arith.constant 0 : index
    %c0_5 = arith.constant 0 : index
    %2 = vector.load %arg4[%c0_2, %c0_3, %c0_4, %c0_5] : memref<1x3x32x32xbf16, #tpu.memory_space<vmem>>, vector<1x1x32x32xbf16>
    %3 = vector.shape_cast %2 : vector<1x1x32x32xbf16> to vector<32x32xbf16>
    %cst = arith.constant dense<0.000000e+00> : vector<8x32xf32>
    %4 = tpu.matmul %1, %3, %cst {dimension_numbers = #tpu.dot_dimension_numbers<[1], [0], [0], [1], [0, 0, 1, 1], [], []>} : vector<8x32xbf16>, vector<32x32xbf16>, vector<8x32xf32> -> vector<8x32xf32>
    %5 = arith.truncf %4 : vector<8x32xf32> to vector<8x32xbf16>
    %6 = vector.extract_strided_slice %5 {offsets = [0, 0], sizes = [8, 8], strides = [1, 1]} : vector<8x32xbf16> to vector<8x8xbf16>
    %c0_6 = arith.constant 0 : index
    %c0_7 = arith.constant 0 : index
    %c0_8 = arith.constant 0 : index
    %c0_9 = arith.constant 0 : index
    %7 = vector.load %arg5[%c0_6, %c0_7, %c0_8, %c0_9] : memref<1x4x8x8xbf16, #tpu.memory_space<vmem>>, vector<1x1x8x8xbf16>
    %8 = vector.shape_cast %7 : vector<1x1x8x8xbf16> to vector<8x8xbf16>
    %9 = vector.shape_cast %6 : vector<8x8xbf16> to vector<1x1x8x8xbf16>
    tpu.vector_store %arg5[%c0_6, %c0_7, %c0_8, %c0_9], %9 {strides = array<i32>} : memref<1x4x8x8xbf16, #tpu.memory_space<vmem>>, vector<1x1x8x8xbf16>,
    %10 = vector.extract_strided_slice %5 {offsets = [0, 8], sizes = [8, 8], strides = [1, 1]} : vector<8x32xbf16> to vector<8x8xbf16>
    %c0_10 = arith.constant 0 : index
    %c1 = arith.constant 1 : index
    %c0_11 = arith.constant 0 : index
    %c0_12 = arith.constant 0 : index
    %11 = vector.load %arg5[%c0_10, %c1, %c0_11, %c0_12] : memref<1x4x8x8xbf16, #tpu.memory_space<vmem>>, vector<1x1x8x8xbf16>
    %12 = vector.shape_cast %11 : vector<1x1x8x8xbf16> to vector<8x8xbf16>
    %13 = vector.shape_cast %10 : vector<8x8xbf16> to vector<1x1x8x8xbf16>
    tpu.vector_store %arg5[%c0_10, %c1, %c0_11, %c0_12], %13 {strides = array<i32>} : memref<1x4x8x8xbf16, #tpu.memory_space<vmem>>, vector<1x1x8x8xbf16>,
    %14 = vector.extract_strided_slice %5 {offsets = [0, 16], sizes = [8, 8], strides = [1, 1]} : vector<8x32xbf16> to vector<8x8xbf16>
    %c0_13 = arith.constant 0 : index
    %c2 = arith.constant 2 : index
    %c0_14 = arith.constant 0 : index
    %c0_15 = arith.constant 0 : index
    %15 = vector.load %arg5[%c0_13, %c2, %c0_14, %c0_15] : memref<1x4x8x8xbf16, #tpu.memory_space<vmem>>, vector<1x1x8x8xbf16>
    %16 = vector.shape_cast %15 : vector<1x1x8x8xbf16> to vector<8x8xbf16>
    %17 = vector.shape_cast %14 : vector<8x8xbf16> to vector<1x1x8x8xbf16>
    tpu.vector_store %arg5[%c0_13, %c2, %c0_14, %c0_15], %17 {strides = array<i32>} : memref<1x4x8x8xbf16, #tpu.memory_space<vmem>>, vector<1x1x8x8xbf16>,
    %18 = vector.extract_strided_slice %5 {offsets = [0, 24], sizes = [8, 8], strides = [1, 1]} : vector<8x32xbf16> to vector<8x8xbf16>
    %c0_16 = arith.constant 0 : index
    %c3 = arith.constant 3 : index
    %c0_17 = arith.constant 0 : index
    %c0_18 = arith.constant 0 : index
    %19 = vector.load %arg5[%c0_16, %c3, %c0_17, %c0_18] : memref<1x4x8x8xbf16, #tpu.memory_space<vmem>>, vector<1x1x8x8xbf16>
    %20 = vector.shape_cast %19 : vector<1x1x8x8xbf16> to vector<8x8xbf16>
    %21 = vector.shape_cast %18 : vector<8x8xbf16> to vector<1x1x8x8xbf16>
    tpu.vector_store %arg5[%c0_16, %c3, %c0_17, %c0_18], %21 {strides = array<i32>} : memref<1x4x8x8xbf16, #tpu.memory_space<vmem>>, vector<1x1x8x8xbf16>,
    %c0_19 = arith.constant 0 : index
    %c1_20 = arith.constant 1 : index
    %c0_21 = arith.constant 0 : index
    %c0_22 = arith.constant 0 : index
    %22 = vector.load %arg4[%c0_19, %c1_20, %c0_21, %c0_22] : memref<1x3x32x32xbf16, #tpu.memory_space<vmem>>, vector<1x1x32x32xbf16>
    %23 = vector.shape_cast %22 : vector<1x1x32x32xbf16> to vector<32x32xbf16>
    %cst_23 = arith.constant dense<0.000000e+00> : vector<8x32xf32>
    %24 = tpu.matmul %1, %23, %cst_23 {dimension_numbers = #tpu.dot_dimension_numbers<[1], [0], [0], [1], [0, 0, 1, 1], [], []>} : vector<8x32xbf16>, vector<32x32xbf16>, vector<8x32xf32> -> vector<8x32xf32>
    %25 = arith.truncf %24 : vector<8x32xf32> to vector<8x32xbf16>
    %26 = vector.extract_strided_slice %25 {offsets = [0, 0], sizes = [8, 8], strides = [1, 1]} : vector<8x32xbf16> to vector<8x8xbf16>
    %c0_24 = arith.constant 0 : index
    %c0_25 = arith.constant 0 : index
    %c0_26 = arith.constant 0 : index
    %c0_27 = arith.constant 0 : index
    %27 = vector.load %arg6[%c0_24, %c0_25, %c0_26, %c0_27] : memref<1x4x8x8xbf16, #tpu.memory_space<vmem>>, vector<1x1x8x8xbf16>
    %28 = vector.shape_cast %27 : vector<1x1x8x8xbf16> to vector<8x8xbf16>
    %29 = vector.shape_cast %26 : vector<8x8xbf16> to vector<1x1x8x8xbf16>
    tpu.vector_store %arg6[%c0_24, %c0_25, %c0_26, %c0_27], %29 {strides = array<i32>} : memref<1x4x8x8xbf16, #tpu.memory_space<vmem>>, vector<1x1x8x8xbf16>,
    %30 = vector.extract_strided_slice %25 {offsets = [0, 8], sizes = [8, 8], strides = [1, 1]} : vector<8x32xbf16> to vector<8x8xbf16>
    %c0_28 = arith.constant 0 : index
    %c1_29 = arith.constant 1 : index
    %c0_30 = arith.constant 0 : index
    %c0_31 = arith.constant 0 : index
    %31 = vector.load %arg6[%c0_28, %c1_29, %c0_30, %c0_31] : memref<1x4x8x8xbf16, #tpu.memory_space<vmem>>, vector<1x1x8x8xbf16>
    %32 = vector.shape_cast %31 : vector<1x1x8x8xbf16> to vector<8x8xbf16>
    %33 = vector.shape_cast %30 : vector<8x8xbf16> to vector<1x1x8x8xbf16>
    tpu.vector_store %arg6[%c0_28, %c1_29, %c0_30, %c0_31], %33 {strides = array<i32>} : memref<1x4x8x8xbf16, #tpu.memory_space<vmem>>, vector<1x1x8x8xbf16>,
    %34 = vector.extract_strided_slice %25 {offsets = [0, 16], sizes = [8, 8], strides = [1, 1]} : vector<8x32xbf16> to vector<8x8xbf16>
    %c0_32 = arith.constant 0 : index
    %c2_33 = arith.constant 2 : index
    %c0_34 = arith.constant 0 : index
    %c0_35 = arith.constant 0 : index
    %35 = vector.load %arg6[%c0_32, %c2_33, %c0_34, %c0_35] : memref<1x4x8x8xbf16, #tpu.memory_space<vmem>>, vector<1x1x8x8xbf16>
    %36 = vector.shape_cast %35 : vector<1x1x8x8xbf16> to vector<8x8xbf16>
    %37 = vector.shape_cast %34 : vector<8x8xbf16> to vector<1x1x8x8xbf16>
    tpu.vector_store %arg6[%c0_32, %c2_33, %c0_34, %c0_35], %37 {strides = array<i32>} : memref<1x4x8x8xbf16, #tpu.memory_space<vmem>>, vector<1x1x8x8xbf16>,
    %38 = vector.extract_strided_slice %25 {offsets = [0, 24], sizes = [8, 8], strides = [1, 1]} : vector<8x32xbf16> to vector<8x8xbf16>
    %c0_36 = arith.constant 0 : index
    %c3_37 = arith.constant 3 : index
    %c0_38 = arith.constant 0 : index
    %c0_39 = arith.constant 0 : index
    %39 = vector.load %arg6[%c0_36, %c3_37, %c0_38, %c0_39] : memref<1x4x8x8xbf16, #tpu.memory_space<vmem>>, vector<1x1x8x8xbf16>
    %40 = vector.shape_cast %39 : vector<1x1x8x8xbf16> to vector<8x8xbf16>
    %41 = vector.shape_cast %38 : vector<8x8xbf16> to vector<1x1x8x8xbf16>
    tpu.vector_store %arg6[%c0_36, %c3_37, %c0_38, %c0_39], %41 {strides = array<i32>} : memref<1x4x8x8xbf16, #tpu.memory_space<vmem>>, vector<1x1x8x8xbf16>,
    %c0_40 = arith.constant 0 : index
    %c2_41 = arith.constant 2 : index
    %c0_42 = arith.constant 0 : index
    %c0_43 = arith.constant 0 : index
    %42 = vector.load %arg4[%c0_40, %c2_41, %c0_42, %c0_43] : memref<1x3x32x32xbf16, #tpu.memory_space<vmem>>, vector<1x1x32x32xbf16>
    %43 = vector.shape_cast %42 : vector<1x1x32x32xbf16> to vector<32x32xbf16>
    %cst_44 = arith.constant dense<0.000000e+00> : vector<8x32xf32>
    %44 = tpu.matmul %1, %43, %cst_44 {dimension_numbers = #tpu.dot_dimension_numbers<[1], [0], [0], [1], [0, 0, 1, 1], [], []>} : vector<8x32xbf16>, vector<32x32xbf16>, vector<8x32xf32> -> vector<8x32xf32>
    %45 = arith.truncf %44 : vector<8x32xf32> to vector<8x32xbf16>
    %46 = vector.extract_strided_slice %45 {offsets = [0, 0], sizes = [8, 8], strides = [1, 1]} : vector<8x32xbf16> to vector<8x8xbf16>
    %c0_45 = arith.constant 0 : index
    %c0_46 = arith.constant 0 : index
    %c0_47 = arith.constant 0 : index
    %c0_48 = arith.constant 0 : index
    %47 = vector.load %arg7[%c0_45, %c0_46, %c0_47, %c0_48] : memref<1x4x8x8xbf16, #tpu.memory_space<vmem>>, vector<1x1x8x8xbf16>
    %48 = vector.shape_cast %47 : vector<1x1x8x8xbf16> to vector<8x8xbf16>
    %49 = vector.shape_cast %46 : vector<8x8xbf16> to vector<1x1x8x8xbf16>
    tpu.vector_store %arg7[%c0_45, %c0_46, %c0_47, %c0_48], %49 {strides = array<i32>} : memref<1x4x8x8xbf16, #tpu.memory_space<vmem>>, vector<1x1x8x8xbf16>,
    %50 = vector.extract_strided_slice %45 {offsets = [0, 8], sizes = [8, 8], strides = [1, 1]} : vector<8x32xbf16> to vector<8x8xbf16>
    %c0_49 = arith.constant 0 : index
    %c1_50 = arith.constant 1 : index
    %c0_51 = arith.constant 0 : index
    %c0_52 = arith.constant 0 : index
    %51 = vector.load %arg7[%c0_49, %c1_50, %c0_51, %c0_52] : memref<1x4x8x8xbf16, #tpu.memory_space<vmem>>, vector<1x1x8x8xbf16>
    %52 = vector.shape_cast %51 : vector<1x1x8x8xbf16> to vector<8x8xbf16>
    %53 = vector.shape_cast %50 : vector<8x8xbf16> to vector<1x1x8x8xbf16>
    tpu.vector_store %arg7[%c0_49, %c1_50, %c0_51, %c0_52], %53 {strides = array<i32>} : memref<1x4x8x8xbf16, #tpu.memory_space<vmem>>, vector<1x1x8x8xbf16>,
    %54 = vector.extract_strided_slice %45 {offsets = [0, 16], sizes = [8, 8], strides = [1, 1]} : vector<8x32xbf16> to vector<8x8xbf16>
    %c0_53 = arith.constant 0 : index
    %c2_54 = arith.constant 2 : index
    %c0_55 = arith.constant 0 : index
    %c0_56 = arith.constant 0 : index
    %55 = vector.load %arg7[%c0_53, %c2_54, %c0_55, %c0_56] : memref<1x4x8x8xbf16, #tpu.memory_space<vmem>>, vector<1x1x8x8xbf16>
    %56 = vector.shape_cast %55 : vector<1x1x8x8xbf16> to vector<8x8xbf16>
    %57 = vector.shape_cast %54 : vector<8x8xbf16> to vector<1x1x8x8xbf16>
    tpu.vector_store %arg7[%c0_53, %c2_54, %c0_55, %c0_56], %57 {strides = array<i32>} : memref<1x4x8x8xbf16, #tpu.memory_space<vmem>>, vector<1x1x8x8xbf16>,
    %58 = vector.extract_strided_slice %45 {offsets = [0, 24], sizes = [8, 8], strides = [1, 1]} : vector<8x32xbf16> to vector<8x8xbf16>
    %c0_57 = arith.constant 0 : index
    %c3_58 = arith.constant 3 : index
    %c0_59 = arith.constant 0 : index
    %c0_60 = arith.constant 0 : index
    %59 = vector.load %arg7[%c0_57, %c3_58, %c0_59, %c0_60] : memref<1x4x8x8xbf16, #tpu.memory_space<vmem>>, vector<1x1x8x8xbf16>
    %60 = vector.shape_cast %59 : vector<1x1x8x8xbf16> to vector<8x8xbf16>
    %61 = vector.shape_cast %58 : vector<8x8xbf16> to vector<1x1x8x8xbf16>
    tpu.vector_store %arg7[%c0_57, %c3_58, %c0_59, %c0_60], %61 {strides = array<i32>} : memref<1x4x8x8xbf16, #tpu.memory_space<vmem>>, vector<1x1x8x8xbf16>,
    return
  }
  func.func @transform_0(%arg0: i32, %arg1: i32, %arg2: i32) -> (i32, i32, i32) {
    %c0_i32 = arith.constant 0 : i32
    %c0_i32_0 = arith.constant 0 : i32
    return %arg0, %arg2, %c0_i32 : i32, i32, i32
  }
  func.func @transform_1(%arg0: i32, %arg1: i32, %arg2: i32) -> (i32, i32, i32, i32) {
    %c0_i32 = arith.constant 0 : i32
    %c0_i32_0 = arith.constant 0 : i32
    %c0_i32_1 = arith.constant 0 : i32
    %c0_i32_2 = arith.constant 0 : i32
    return %arg1, %c0_i32, %c0_i32_0, %c0_i32_1 : i32, i32, i32, i32
  }
  func.func @transform_2(%arg0: i32, %arg1: i32, %arg2: i32) -> (i32, i32, i32, i32) {
    %c0_i32 = arith.constant 0 : i32
    %c0_i32_0 = arith.constant 0 : i32
    return %arg0, %arg1, %arg2, %c0_i32 : i32, i32, i32, i32
  }
  func.func @transform_3(%arg0: i32, %arg1: i32, %arg2: i32) -> (i32, i32, i32, i32) {
    %c0_i32 = arith.constant 0 : i32
    %c0_i32_0 = arith.constant 0 : i32
    return %arg0, %arg1, %arg2, %c0_i32 : i32, i32, i32, i32
  }
  func.func @transform_4(%arg0: i32, %arg1: i32, %arg2: i32) -> (i32, i32, i32, i32) {
    %c0_i32 = arith.constant 0 : i32
    %c0_i32_0 = arith.constant 0 : i32
    return %arg0, %arg1, %arg2, %c0_i32 : i32, i32, i32, i32
  }
}

</mosaic_0001>

<llo_original>
// kernel: tpu_custom_call.1
$region0: #{tpu_custom_call.1}
  #allocation0 [shape = 'u32[]', space=smem, size = 0x4, offset = 0x4, fixed_abs, tag = 'smem constant byte address 0x4 - core index']
  #allocation1 [shape = 'u32[72,128]{1,0:T(1,128)}', space=vmem, size = 0x9000, scoped, tag = 'internal scratch']
  %s0 = inlined_call_operand.hbm [shape: bf16[2,8,32], index: 0, kind: input, shape index: {}]
  %s1 = inlined_call_operand.hbm [shape: bf16[1,3,32,32], index: 1, kind: input, shape index: {}]
  %s2 = inlined_call_operand.hbm [shape: bf16[2,4,8,8], index: 2, kind: output, shape index: {0}]
  %s3 = inlined_call_operand.hbm [shape: bf16[2,4,8,8], index: 3, kind: output, shape index: {1}]
  %s4 = inlined_call_operand.hbm [shape: bf16[2,4,8,8], index: 4, kind: output, shape index: {2}]
  %5 = xla_tuple %s2, %s3, %s4
  %s6 = sld [smem:[#allocation0]]
  $region65: #{tpu_custom_call.1} parent=0
    _
  %s8 = ssub.s32 1, %s6
  %s9 = scalar_select 0, %s8, %s6
  $region1: #{tpu_custom_call.1} parent=0
    #allocation2 [shape = 'u8[4096]{0}', space=vmem, size = 0x1000, scoped, tag = 'input window, operand 0']
    #allocation3 [shape = 's32[2]{0}', space=sflag, size = 0x8, scoped, tag = 'scoped memory for tpu_custom_call.1']
    #allocation4 [shape = 's32[2]{0}', space=sflag, size = 0x8, scoped, tag = 'scoped memory for tpu_custom_call.1']
    #allocation5 [shape = 'u8[24576]{0}', space=vmem, size = 0x6000, scoped, tag = 'input window, operand 1, single buffered']
    #allocation6 [shape = 's32[1]{0}', space=sflag, size = 0x4, scoped, tag = 'scoped memory for tpu_custom_call.1']
    #allocation7 [shape = 'u8[16384]{0}', space=vmem, size = 0x4000, scoped, tag = 'output window, operand 0']
    #allocation8 [shape = 'u8[16384]{0}', space=vmem, size = 0x4000, scoped, tag = 'output window, operand 1']
    #allocation9 [shape = 's32[2]{0}', space=sflag, size = 0x8, scoped, tag = 'scoped memory for tpu_custom_call.1']
    #allocation10 [shape = 'u8[16384]{0}', space=vmem, size = 0x4000, scoped, tag = 'output window, operand 2']
    %10 = vsyncpa [#allocation3], 0
    %s11 = scalar_lea.sflag [#allocation3], 1
    %12 = vsyncpa %s11, 0
    %13 = vsyncpa [#allocation6], 0
    %14 = vsyncpa [#allocation4], 0
    %s15 = scalar_lea.sflag [#allocation4], 1
    %16 = vsyncpa %s15, 0
    %17 = vsyncpa [#allocation9], 0
    %s18 = scalar_lea.sflag [#allocation9], 1
    %19 = vsyncpa %s18, 0
    loop: start=0, step=1, limit=4
    $region2: #{tpu_custom_call.1} parent=1 // loop_pre_header
      _
    $region3: #{tpu_custom_call.1} parent=1 // loop_header
      %s21 = sphi 0, %s25
      %p22 = scmp.ge.s32.totalorder %s21, 4
      %s28 = sphi 0, %s47
      %s29 = sphi 0, %s43
      %s30 = sphi 0, %s39
      %s31 = sphi 0, %s28
      %s32 = sphi 0, %s29
      %s33 = sphi 0, %s30
      %s34 = sphi 0, %s31
      %s35 = sphi 0, %s32
      %s36 = sphi 0, %s33
      %s52 = sphi 0, %s54
      %s55 = sphi 0, %s52
      %s56 = sphi 0, %s55
      %s72 = sphi 0, %s56
      %s78 = sphi 0, %s80
      %s81 = sphi 0, %s78
      %s82 = sphi 0, %s81
      %s98 = sphi 0, %s82
      %s108 = sphi 0, %s110
      %s111 = sphi 0, %s108
      %s112 = sphi 0, %s111
      %s128 = sphi 0, %s112
      %s138 = sphi 0, %s140
      %s141 = sphi 0, %s138
      %s142 = sphi 0, %s141
      %s158 = sphi 0, %s142
      %s168 = sphi 0, %s170
      %s171 = sphi 0, %s168
      %s172 = sphi 0, %s171
      %s188 = sphi 0, %s172
    $region4: #{tpu_custom_call.1} parent=1 // loop_header_branch
      %24 = sbr.rel (%p22) target = $region8
    $region5: #{tpu_custom_call.1} parent=1 // loop_body
      %s26 = ssub.s32 %s21, 1
      %s27 = ssub.s32 %s21, 2
      %s37 = sadd.s32 1, %s30
      %p38 = scmp.ge.s32.totalorder %s37, 1
      %s39 = scalar_select %p38, 0, %s37
      %s40 = sadd.s32 1, %s29
      %s41 = scalar_select %p38, %s40, %s29
      %p42 = scmp.ge.s32.totalorder %s41, 1
      %s43 = scalar_select %p42, 0, %s41
      %s44 = sadd.s32 1, %s28
      %s45 = scalar_select %p42, %s44, %s28
      %p46 = scmp.ge.s32.totalorder %s45, 2
      %s47 = scalar_select %p46, 0, %s45
      %s48 = ssub.s32 %s28, %s47
      %s49 = ssub.s32 %s30, %s39
      %s50 = sor.u32 %s48, %s49
      %p51 = scmp.eq.s32.totalorder %s50, 0
      %s53 = sadd.s32 %s52, 1
      %s54 = scalar_select %p51, %s52, %s53
      %p57 = pneg %p51
      %p58 = scmp.eq.s32.totalorder %s21, 1
      %p59 = por %p57, %p58
      %p60 = scmp.ne.s32.totalorder %s52, %s55
      %p61 = scmp.eq.s32.totalorder %s21, 0
      %p62 = por %p60, %p61
      %p63 = scmp.ne.s32.totalorder %s52, %s55
      %p64 = scmp.eq.s32.totalorder %s26, 1
      %p65 = por %p63, %p64
      %p66 = scmp.ne.s32.totalorder %s55, %s56
      %p67 = scmp.eq.s32.totalorder %s26, 0
      %p68 = por %p66, %p67
      %p69 = scmp.ne.s32.totalorder %s55, %s56
      %p70 = scmp.eq.s32.totalorder %s27, 1
      %p71 = por %p69, %p70
      %p73 = scmp.ne.s32.totalorder %s56, %s72
      %p74 = scmp.eq.s32.totalorder %s27, 0
      %p75 = por %p73, %p74
      %s76 = ssub.s32 %s29, %s43
      %p77 = scmp.eq.s32.totalorder %s76, 0
      %s79 = sadd.s32 %s78, 1
      %s80 = scalar_select %p77, %s78, %s79
      %p83 = pneg %p77
      %p84 = scmp.eq.s32.totalorder %s21, 1
      %p85 = por %p83, %p84
      %p86 = scmp.ne.s32.totalorder %s78, %s81
      %p87 = scmp.eq.s32.totalorder %s21, 0
      %p88 = por %p86, %p87
      %p89 = scmp.ne.s32.totalorder %s78, %s81
      %p90 = scmp.eq.s32.totalorder %s26, 1
      %p91 = por %p89, %p90
      %p92 = scmp.ne.s32.totalorder %s81, %s82
      %p93 = scmp.eq.s32.totalorder %s26, 0
      %p94 = por %p92, %p93
      %p95 = scmp.ne.s32.totalorder %s81, %s82
      %p96 = scmp.eq.s32.totalorder %s27, 1
      %p97 = por %p95, %p96
      %p99 = scmp.ne.s32.totalorder %s82, %s98
      %p100 = scmp.eq.s32.totalorder %s27, 0
      %p101 = por %p99, %p100
      %s102 = ssub.s32 %s28, %s47
      %s103 = ssub.s32 %s29, %s43
      %s104 = sor.u32 %s102, %s103
      %s105 = ssub.s32 %s30, %s39
      %s106 = sor.u32 %s104, %s105
      %p107 = scmp.eq.s32.totalorder %s106, 0
      %s109 = sadd.s32 %s108, 1
      %s110 = scalar_select %p107, %s108, %s109
      %p113 = pneg %p107
      %p114 = scmp.eq.s32.totalorder %s21, 1
      %p115 = por %p113, %p114
      %p116 = scmp.ne.s32.totalorder %s108, %s111
      %p117 = scmp.eq.s32.totalorder %s21, 0
      %p118 = por %p116, %p117
      %p119 = scmp.ne.s32.totalorder %s108, %s111
      %p120 = scmp.eq.s32.totalorder %s26, 1
      %p121 = por %p119, %p120
      %p122 = scmp.ne.s32.totalorder %s111, %s112
      %p123 = scmp.eq.s32.totalorder %s26, 0
      %p124 = por %p122, %p123
      %p125 = scmp.ne.s32.totalorder %s111, %s112
      %p126 = scmp.eq.s32.totalorder %s27, 1
      %p127 = por %p125, %p126
      %p129 = scmp.ne.s32.totalorder %s112, %s128
      %p130 = scmp.eq.s32.totalorder %s27, 0
      %p131 = por %p129, %p130
      %s132 = ssub.s32 %s28, %s47
      %s133 = ssub.s32 %s29, %s43
      %s134 = sor.u32 %s132, %s133
      %s135 = ssub.s32 %s30, %s39
      %s136 = sor.u32 %s134, %s135
      %p137 = scmp.eq.s32.totalorder %s136, 0
      %s139 = sadd.s32 %s138, 1
      %s140 = scalar_select %p137, %s138, %s139
      %p143 = pneg %p137
      %p144 = scmp.eq.s32.totalorder %s21, 1
      %p145 = por %p143, %p144
      %p146 = scmp.ne.s32.totalorder %s138, %s141
      %p147 = scmp.eq.s32.totalorder %s21, 0
      %p148 = por %p146, %p147
      %p149 = scmp.ne.s32.totalorder %s138, %s141
      %p150 = scmp.eq.s32.totalorder %s26, 1
      %p151 = por %p149, %p150
      %p152 = scmp.ne.s32.totalorder %s141, %s142
      %p153 = scmp.eq.s32.totalorder %s26, 0
      %p154 = por %p152, %p153
      %p155 = scmp.ne.s32.totalorder %s141, %s142
      %p156 = scmp.eq.s32.totalorder %s27, 1
      %p157 = por %p155, %p156
      %p159 = scmp.ne.s32.totalorder %s142, %s158
      %p160 = scmp.eq.s32.totalorder %s27, 0
      %p161 = por %p159, %p160
      %s162 = ssub.s32 %s28, %s47
      %s163 = ssub.s32 %s29, %s43
      %s164 = sor.u32 %s162, %s163
      %s165 = ssub.s32 %s30, %s39
      %s166 = sor.u32 %s164, %s165
      %p167 = scmp.eq.s32.totalorder %s166, 0
      %s169 = sadd.s32 %s168, 1
      %s170 = scalar_select %p167, %s168, %s169
      %p173 = pneg %p167
      %p174 = scmp.eq.s32.totalorder %s21, 1
      %p175 = por %p173, %p174
      %p176 = scmp.ne.s32.totalorder %s168, %s171
      %p177 = scmp.eq.s32.totalorder %s21, 0
      %p178 = por %p176, %p177
      %p179 = scmp.ne.s32.totalorder %s168, %s171
      %p180 = scmp.eq.s32.totalorder %s26, 1
      %p181 = por %p179, %p180
      %p182 = scmp.ne.s32.totalorder %s171, %s172
      %p183 = scmp.eq.s32.totalorder %s26, 0
      %p184 = por %p182, %p183
      %p185 = scmp.ne.s32.totalorder %s171, %s172
      %p186 = scmp.eq.s32.totalorder %s27, 1
      %p187 = por %p185, %p186
      %p189 = scmp.ne.s32.totalorder %s172, %s188
      %p190 = scmp.eq.s32.totalorder %s27, 0
      %p191 = por %p189, %p190
      %p192 = scmp.le.s32.totalorder 1, %s21
      %p193 = scmp.lt.s32.totalorder %s21, 3
      %p194 = pnand %p192, %p193
      %p195 = pneg %p194
      // Predicated region
      $region9: #{tpu_custom_call.1} parent=5 // pred_check
        _
      $region10: #{tpu_custom_call.1} parent=5 // pred_check_branch
        %197 = sbr.rel (%p194) target = $region12
      $region11: #{tpu_custom_call.1} parent=5 // pred_region
        %s198 = ssub.s32 %s21, 1
        // Predicated region
        $region13: #{tpu_custom_call.1} parent=11 // pred_check
          %p199 = pneg %p94
        $region14: #{tpu_custom_call.1} parent=11 // pred_check_branch
          %201 = sbr.rel (%p199) target = $region16
        $region15: #{tpu_custom_call.1} parent=11 // pred_region
          %203 = vsyncadd [#allocation6], 0
          %s204 = smul.addr %s32, 12
          %s205 = smul.addr %s204, 4
          %s206 = scalar_lea.hbm %s1, %s205
          %s207 = sshll.u32 %s206, 4
          %s208 = int_to_ptr.hbm [resolvable:$true] %s207
          %s209 = sshll.u32 [#allocation5], 4
          %s210 = int_to_ptr.vmem [resolvable:$true] %s209
          %215 = dma.hbm_to_vmem [thread:$0]  %s208, 768, %s210, [#allocation6], 64, 64, 4
        $region16: #{tpu_custom_call.1} parent=11 // pred_fallthru
          _
      $region12: #{tpu_custom_call.1} parent=5 // pred_fallthru
        _
      %p216 = scmp.lt.s32.totalorder %s21, 2
      // Predicated region
      $region17: #{tpu_custom_call.1} parent=5 // pred_check
        %p217 = pneg %p216
      $region18: #{tpu_custom_call.1} parent=5 // pred_check_branch
        %219 = sbr.rel (%p217) target = $region20
      $region19: #{tpu_custom_call.1} parent=5 // pred_region
        // Predicated region
        $region21: #{tpu_custom_call.1} parent=19 // pred_check
          %p220 = pneg %p62
        $region22: #{tpu_custom_call.1} parent=19 // pred_check_branch
          %222 = sbr.rel (%p220) target = $region24
        $region23: #{tpu_custom_call.1} parent=19 // pred_region
          %s223 = sand.u32 %s52, 1
          %s224 = scalar_lea.sflag [#allocation3], %s223
          %s225 = sand.u32 %s52, 1
          %s226 = smul.addr %s225, 4
          %s227 = scalar_lea.vmem [#allocation2], %s226
          %229 = vsyncadd %s224, 0
          %s230 = sadd.s32 %s30, %s28
          %s231 = smul.addr %s230, 4
          %s232 = scalar_lea.hbm %s0, %s231
          %s234 = sshll.u32 %s232, 4
          %s235 = int_to_ptr.hbm [resolvable:$true] %s234
          %s236 = sshll.u32 %s227, 4
          %s237 = int_to_ptr.vmem [resolvable:$true] %s236
          %239 = dma.hbm_to_vmem [thread:$0]  %s235, 64, %s237, %s224
        $region24: #{tpu_custom_call.1} parent=19 // pred_fallthru
          _
      $region20: #{tpu_custom_call.1} parent=5 // pred_fallthru
        _
      %p240 = scmp.le.s32.totalorder 1, %s21
      %p241 = scmp.lt.s32.totalorder %s21, 3
      %p242 = pnand %p240, %p241
      %p243 = pneg %p242
      // Predicated region
      $region25: #{tpu_custom_call.1} parent=5 // pred_check
        _
      $region26: #{tpu_custom_call.1} parent=5 // pred_check_branch
        %245 = sbr.rel (%p242) target = $region28
      $region27: #{tpu_custom_call.1} parent=5 // pred_region
        %s246 = ssub.s32 %s21, 1
        %s247 = sand.u32 %s55, 1
        %s248 = scalar_lea.sflag [#allocation3], %s247
        %s249 = sand.u32 %s55, 1
        %s250 = smul.addr %s249, 4
        %s251 = scalar_lea.vmem [#allocation2], %s250
        // Predicated region
        $region29: #{tpu_custom_call.1} parent=27 // pred_check
          %p252 = pneg %p68
        $region30: #{tpu_custom_call.1} parent=27 // pred_check_branch
          %254 = sbr.rel (%p252) target = $region32
        $region31: #{tpu_custom_call.1} parent=27 // pred_region
          %256 = dma.done %s248, 64
        $region32: #{tpu_custom_call.1} parent=27 // pred_fallthru
          _
        // Predicated region
        $region33: #{tpu_custom_call.1} parent=27 // pred_check
          %p257 = pneg %p94
        $region34: #{tpu_custom_call.1} parent=27 // pred_check_branch
          %259 = sbr.rel (%p257) target = $region36
        $region35: #{tpu_custom_call.1} parent=27 // pred_region
          %261 = dma.done [#allocation6], 768
        $region36: #{tpu_custom_call.1} parent=27 // pred_fallthru
          _
        %s262 = sand.u32 %s55, 1
        %s263 = scalar_lea.sflag [#allocation3], %s262
        %s264 = sand.u32 %s55, 1
        %s265 = smul.addr %s264, 4
        %s266 = scalar_lea.vmem [#allocation2], %s265
        %p267 = pneg %p68
        %p268 = pneg %p65
        %p269 = pneg %p94
        %p270 = pneg %p91
        %p271 = pneg %p124
        %p272 = pneg %p121
        %s273 = sand.u32 %s111, 1
        %s274 = scalar_lea.sflag [#allocation4], %s273
        %s275 = sand.u32 %s111, 1
        %s276 = smul.addr %s275, 16
        %s277 = scalar_lea.vmem [#allocation7], %s276
        %p278 = pneg %p154
        %p279 = pneg %p151
        %s280 = sand.u32 %s26, 1
        %s281 = scalar_lea.sflag [#allocation9], %s280
        %s282 = sand.u32 %s141, 1
        %s283 = smul.addr %s282, 16
        %s284 = scalar_lea.vmem [#allocation8], %s283
        %p285 = pneg %p184
        %p286 = pneg %p181
        %s287 = sand.u32 %s26, 1
        %s288 = scalar_lea.sflag [#allocation9], %s287
        %s289 = sand.u32 %s171, 1
        %s290 = smul.addr %s289, 16
        %s291 = scalar_lea.vmem [#allocation10], %s290
        %s292 = smul.u32 4, %s32
        %s293 = smul.u32 4, %s32
        %s294 = smul.u32 4, %s32
        %v296 = vld [vmem:[%s251] sm:$0xf]
        %v297 = vld [vmem:[#allocation5] sm:$0xf]
        %v298 = vld [vmem:[#allocation5 + $0x4] sm:$0xf]
        %v299 = vld [vmem:[#allocation5 + $0x8] sm:$0xf]
        %v300 = vld [vmem:[#allocation5 + $0xc] sm:$0xf]
        %v305 = vunpack.c.l.b16 %v297
        %v306 = vunpack.c.l.b16 %v298
        %v307 = vunpack.c.l.b16 %v299
        %v308 = vunpack.c.l.b16 %v300
        %v309 = vpack.c.b16 %v306, %v305
        %v310 = vpack.c.b16 %v308, %v307
        %vm313 = vcmask 261120
        %v315 = vsel %vm313, %v296, 0
        %317 = vmatpush.bf16.msra.mxu0 0
        %318 = vmatpush.bf16.msra.mxu0 0
        %319 = vmatpush.bf16.msra.mxu0 0
        %320 = vmatpush.bf16.msra.mxu0 0
        %321 = vmatpush.bf16.msra.mxu0 0
        %322 = vmatpush.bf16.msra.mxu0 0
        %323 = vmatpush.bf16.msra.mxu0 %v310
        %324 = vmatpush.bf16.msra.mxu0 %v309
        %325 = vmatmul.bf16.gmra.mxu0 %v315
        %v326 = vpop.f32.mrf.mxu0
        %v327 = vadd.f32 0.0, %v326
        %v328 = vpop.f32.mrf.mxu0
        %329 = vdwg.mxu0
        %v330 = vpack.c.bf16 %v327, %v327
        %vm331 = vcmask 60416
        %332 = vst.msk [vmem:[%s277] sm:$0xf] %vm331, %v330
        %334 = vrot.lane.b32.xlu0 %v330, 120
        %v335 = vpop.permute.xlu0 %334
        %s337 = scalar_lea.vmem %s277, 4 [#allocation7]
        %338 = vst.msk [vmem:[%s337] sm:$0xf] %vm331, %v335
        %339 = vrot.lane.b32.xlu0 %v330, 112
        %v340 = vpop.permute.xlu0 %339
        %s342 = scalar_lea.vmem %s277, 8 [#allocation7]
        %343 = vst.msk [vmem:[%s342] sm:$0xf] %vm331, %v340
        %344 = vrot.lane.b32.xlu0 %v330, 104
        %v345 = vpop.permute.xlu0 %344
        %s347 = scalar_lea.vmem %s277, 12 [#allocation7]
        %348 = vst.msk [vmem:[%s347] sm:$0xf] %vm331, %v345
        %s349 = scalar_lea.vmem [#allocation5], 16
        %v350 = vld [vmem:[%s349] sm:$0xf]
        %v351 = vld [vmem:[%s349 + $0x4] sm:$0xf]
        %v352 = vld [vmem:[%s349 + $0x8] sm:$0xf]
        %v353 = vld [vmem:[%s349 + $0xc] sm:$0xf]
        %v358 = vunpack.c.l.b16 %v350
        %v359 = vunpack.c.l.b16 %v351
        %v360 = vunpack.c.l.b16 %v352
        %v361 = vunpack.c.l.b16 %v353
        %v362 = vpack.c.b16 %v359, %v358
        %v363 = vpack.c.b16 %v361, %v360
        %366 = vmatpush.bf16.msra.mxu0 0
        %367 = vmatpush.bf16.msra.mxu0 0
        %368 = vmatpush.bf16.msra.mxu0 0
        %369 = vmatpush.bf16.msra.mxu0 0
        %370 = vmatpush.bf16.msra.mxu0 0
        %371 = vmatpush.bf16.msra.mxu0 0
        %372 = vmatpush.bf16.msra.mxu0 %v363
        %373 = vmatpush.bf16.msra.mxu0 %v362
        %374 = vmatmul.bf16.gmra.mxu0 %v315
        %v375 = vpop.f32.mrf.mxu0
        %v376 = vadd.f32 0.0, %v375
        %v377 = vpop.f32.mrf.mxu0
        %378 = vdwg.mxu0
        %v379 = vpack.c.bf16 %v376, %v376
        %380 = vst.msk [vmem:[%s284] sm:$0xf] %vm331, %v379
        %382 = vrot.lane.b32.xlu0 %v379, 120
        %v383 = vpop.permute.xlu0 %382
        %s385 = scalar_lea.vmem %s284, 4 [#allocation8]
        %386 = vst.msk [vmem:[%s385] sm:$0xf] %vm331, %v383
        %387 = vrot.lane.b32.xlu0 %v379, 112
        %v388 = vpop.permute.xlu0 %387
        %s390 = scalar_lea.vmem %s284, 8 [#allocation8]
        %391 = vst.msk [vmem:[%s390] sm:$0xf] %vm331, %v388
        %392 = vrot.lane.b32.xlu0 %v379, 104
        %v393 = vpop.permute.xlu0 %392
        %s395 = scalar_lea.vmem %s284, 12 [#allocation8]
        %396 = vst.msk [vmem:[%s395] sm:$0xf] %vm331, %v393
        %s397 = scalar_lea.vmem [#allocation5], 32
        %v398 = vld [vmem:[%s397] sm:$0xf]
        %v399 = vld [vmem:[%s397 + $0x4] sm:$0xf]
        %v400 = vld [vmem:[%s397 + $0x8] sm:$0xf]
        %v401 = vld [vmem:[%s397 + $0xc] sm:$0xf]
        %v406 = vunpack.c.l.b16 %v398
        %v407 = vunpack.c.l.b16 %v399
        %v408 = vunpack.c.l.b16 %v400
        %v409 = vunpack.c.l.b16 %v401
        %v410 = vpack.c.b16 %v407, %v406
        %v411 = vpack.c.b16 %v409, %v408
        %414 = vmatpush.bf16.msra.mxu0 0
        %415 = vmatpush.bf16.msra.mxu0 0
        %416 = vmatpush.bf16.msra.mxu0 0
        %417 = vmatpush.bf16.msra.mxu0 0
        %418 = vmatpush.bf16.msra.mxu0 0
        %419 = vmatpush.bf16.msra.mxu0 0
        %420 = vmatpush.bf16.msra.mxu0 %v411
        %421 = vmatpush.bf16.msra.mxu0 %v410
        %422 = vmatmul.bf16.gmra.mxu0 %v315
        %v423 = vpop.f32.mrf.mxu0
        %v424 = vadd.f32 0.0, %v423
        %v425 = vpop.f32.mrf.mxu0
        %426 = vdwg.mxu0
        %v427 = vpack.c.bf16 %v424, %v424
        %428 = vst.msk [vmem:[%s291] sm:$0xf] %vm331, %v427
        %430 = vrot.lane.b32.xlu0 %v427, 120
        %v431 = vpop.permute.xlu0 %430
        %s433 = scalar_lea.vmem %s291, 4 [#allocation10]
        %434 = vst.msk [vmem:[%s433] sm:$0xf] %vm331, %v431
        %435 = vrot.lane.b32.xlu0 %v427, 112
        %v436 = vpop.permute.xlu0 %435
        %s438 = scalar_lea.vmem %s291, 8 [#allocation10]
        %439 = vst.msk [vmem:[%s438] sm:$0xf] %vm331, %v436
        %440 = vrot.lane.b32.xlu0 %v427, 104
        %v441 = vpop.permute.xlu0 %440
        %s443 = scalar_lea.vmem %s291, 12 [#allocation10]
        %444 = vst.msk [vmem:[%s443] sm:$0xf] %vm331, %v441
        %s445 = sand.u32 %s111, 1
        %s446 = scalar_lea.sflag [#allocation4], %s445
        %s447 = sand.u32 %s111, 1
        %s448 = smul.addr %s447, 16
        %s449 = scalar_lea.vmem [#allocation7], %s448
        %s450 = sand.u32 %s26, 1
        %s451 = scalar_lea.sflag [#allocation9], %s450
        %s452 = sand.u32 %s141, 1
        %s453 = smul.addr %s452, 16
        %s454 = scalar_lea.vmem [#allocation8], %s453
        %s455 = sand.u32 %s26, 1
        %s456 = scalar_lea.sflag [#allocation9], %s455
        %s457 = sand.u32 %s171, 1
        %s458 = smul.addr %s457, 16
        %s459 = scalar_lea.vmem [#allocation10], %s458
        // Predicated region
        $region37: #{tpu_custom_call.1} parent=27 // pred_check
          %p460 = pneg %p121
        $region38: #{tpu_custom_call.1} parent=27 // pred_check_branch
          %462 = sbr.rel (%p460) target = $region40
        $region39: #{tpu_custom_call.1} parent=27 // pred_region
          %s463 = smul.u32 4, %s32
          %465 = vsyncadd %s446, 0
          %s466 = sadd.s32 %s33, %s463
          %s467 = smul.addr %s31, 4
          %s468 = sadd.s32 %s466, %s467
          %s469 = smul.addr %s468, 4
          %s470 = scalar_lea.hbm %s2, %s469
          %s471 = sshll.u32 %s449, 4
          %s472 = int_to_ptr.vmem [resolvable:$true] %s471
          %s473 = sshll.u32 %s470, 4
          %s474 = int_to_ptr.hbm [resolvable:$true] %s473
          %479 = dma.vmem_to_hbm [thread:$0]  %s472, 256, %s474, %s446, 64, 64, 4
        $region40: #{tpu_custom_call.1} parent=27 // pred_fallthru
          _
        // Predicated region
        $region41: #{tpu_custom_call.1} parent=27 // pred_check
          %p480 = pneg %p151
        $region42: #{tpu_custom_call.1} parent=27 // pred_check_branch
          %482 = sbr.rel (%p480) target = $region44
        $region43: #{tpu_custom_call.1} parent=27 // pred_region
          %s483 = smul.u32 4, %s32
          %485 = vsyncadd %s451, 0
          %s486 = sadd.s32 %s33, %s483
          %s487 = smul.addr %s31, 4
          %s488 = sadd.s32 %s486, %s487
          %s489 = smul.addr %s488, 4
          %s490 = scalar_lea.hbm %s3, %s489
          %s491 = sshll.u32 %s454, 4
          %s492 = int_to_ptr.vmem [resolvable:$true] %s491
          %s493 = sshll.u32 %s490, 4
          %s494 = int_to_ptr.hbm [resolvable:$true] %s493
          %499 = dma.vmem_to_hbm [thread:$0]  %s492, 256, %s494, %s451, 64, 64, 4
        $region44: #{tpu_custom_call.1} parent=27 // pred_fallthru
          _
        // Predicated region
        $region45: #{tpu_custom_call.1} parent=27 // pred_check
          %p500 = pneg %p181
        $region46: #{tpu_custom_call.1} parent=27 // pred_check_branch
          %502 = sbr.rel (%p500) target = $region48
        $region47: #{tpu_custom_call.1} parent=27 // pred_region
          %s503 = smul.u32 4, %s32
          %505 = vsyncadd %s456, 0
          %s506 = sadd.s32 %s33, %s503
          %s507 = smul.addr %s31, 4
          %s508 = sadd.s32 %s506, %s507
          %s509 = smul.addr %s508, 4
          %s510 = scalar_lea.hbm %s4, %s509
          %s511 = sshll.u32 %s459, 4
          %s512 = int_to_ptr.vmem [resolvable:$true] %s511
          %s513 = sshll.u32 %s510, 4
          %s514 = int_to_ptr.hbm [resolvable:$true] %s513
          %519 = dma.vmem_to_hbm [thread:$0]  %s512, 256, %s514, %s456, 64, 64, 4
        $region48: #{tpu_custom_call.1} parent=27 // pred_fallthru
          _
      $region28: #{tpu_custom_call.1} parent=5 // pred_fallthru
        _
      %p520 = scmp.le.s32.totalorder 2, %s21
      // Predicated region
      $region49: #{tpu_custom_call.1} parent=5 // pred_check
        %p521 = pneg %p520
      $region50: #{tpu_custom_call.1} parent=5 // pred_check_branch
        %523 = sbr.rel (%p521) target = $region52
      $region51: #{tpu_custom_call.1} parent=5 // pred_region
        %s524 = ssub.s32 %s21, 2
        // Predicated region
        $region53: #{tpu_custom_call.1} parent=51 // pred_check
          %p525 = pneg %p127
        $region54: #{tpu_custom_call.1} parent=51 // pred_check_branch
          %527 = sbr.rel (%p525) target = $region56
        $region55: #{tpu_custom_call.1} parent=51 // pred_region
          %s528 = sand.u32 %s112, 1
          %s529 = scalar_lea.sflag [#allocation4], %s528
          %s530 = sand.u32 %s112, 1
          %s531 = smul.addr %s530, 16
          %s532 = scalar_lea.vmem [#allocation7], %s531
          %534 = dma.done %s529, 256
        $region56: #{tpu_custom_call.1} parent=51 // pred_fallthru
          _
        // Predicated region
        $region57: #{tpu_custom_call.1} parent=51 // pred_check
          %p535 = pneg %p157
        $region58: #{tpu_custom_call.1} parent=51 // pred_check_branch
          %537 = sbr.rel (%p535) target = $region60
        $region59: #{tpu_custom_call.1} parent=51 // pred_region
          %s538 = sand.u32 %s27, 1
          %s539 = scalar_lea.sflag [#allocation9], %s538
          %s540 = sand.u32 %s142, 1
          %s541 = smul.addr %s540, 16
          %s542 = scalar_lea.vmem [#allocation8], %s541
          %544 = dma.done %s539, 256
        $region60: #{tpu_custom_call.1} parent=51 // pred_fallthru
          _
        // Predicated region
        $region61: #{tpu_custom_call.1} parent=51 // pred_check
          %p545 = pneg %p187
        $region62: #{tpu_custom_call.1} parent=51 // pred_check_branch
          %547 = sbr.rel (%p545) target = $region64
        $region63: #{tpu_custom_call.1} parent=51 // pred_region
          %s548 = sand.u32 %s27, 1
          %s549 = scalar_lea.sflag [#allocation9], %s548
          %s550 = sand.u32 %s172, 1
          %s551 = smul.addr %s550, 16
          %s552 = scalar_lea.vmem [#allocation10], %s551
          %554 = dma.done %s549, 256
        $region64: #{tpu_custom_call.1} parent=51 // pred_fallthru
          _
      $region52: #{tpu_custom_call.1} parent=5 // pred_fallthru
        _
    $region6: #{tpu_custom_call.1} parent=1 // loop_footer
      %s25 = sadd.s32 1, %s21
    $region7: #{tpu_custom_call.1} parent=1 // loop_footer_branch
      %20 = sbr.rel target = $region3
    $region8: #{tpu_custom_call.1} parent=1 // loop_exit
      _
    %555 = vsyncpa [#allocation3], 1
    %s556 = scalar_lea.sflag [#allocation3], 1
    %557 = vsyncpa %s556, 1
    %558 = vsyncpa [#allocation6], 1
    %559 = vsyncpa [#allocation4], 1
    %s560 = scalar_lea.sflag [#allocation4], 1
    %561 = vsyncpa %s560, 1
    %562 = vsyncpa [#allocation9], 1
    %s563 = scalar_lea.sflag [#allocation9], 1
    %564 = vsyncpa %s563, 1

</llo_original>
